<compile_context>
chip_gen: v5e
topology: v5e:2x2
jax: 0.10.0
libtpu: 0.0.40
codegen_flags: <defaults>
</compile_context>

<pallas_src>
import jax
import jax.numpy as jnp
from jax.experimental import pallas as pl
from jax.experimental.pallas import tpu as pltpu

D_MODEL = 32
D_FF = 64
EPS = 1e-6
LANES = 128


def ffn_kernel(x_ref, w1_ref, b1_ref, w2_ref, b2_ref, g_ref, beta_ref, seg_ref, o_ref):
    x = x_ref[...]                                                     # (tm, 128) f32
    xb = x.astype(jnp.bfloat16)

    # w_1 -> ReLU  (bf16 MXU operands, f32 accumulate; block-diagonal weights
    # process `pack` tokens per 128-lane row)
    h1 = jnp.dot(xb, w1_ref[...], preferred_element_type=jnp.float32) + b1_ref[...]
    h1 = jnp.maximum(h1, 0.0)

    # w_2
    h2 = jnp.dot(h1.astype(jnp.bfloat16), w2_ref[...],
                 preferred_element_type=jnp.float32) + b2_ref[...]

    # TODO(synk): dropout is identity in eval mode; training-mode dropout (RNG mask
    # via pltpu.prng_seed / prng_random_bits) is not implemented here.

    # residual
    y = h2 + x

    # LayerNorm per token (= per d_model-wide lane segment).  Two-pass:
    #   mean = y @ seg  ;  var = (y-mean)^2 @ seg
    # Both reductions run on the MXU in bf16 (f32 accumulate) — no cancellation
    # risk (variance is a mean of squares), and only 2 bf16 pushes per 8 rows,
    # keeping the kernel HBM-bound on every generation.
    seg = seg_ref[...]                                                 # (128, 128) bf16
    mean = jnp.dot(y.astype(jnp.bfloat16), seg, preferred_element_type=jnp.float32)
    d = y - mean
    db = d.astype(jnp.bfloat16)
    var = jnp.dot(db * db, seg, preferred_element_type=jnp.float32)
    yn = d * jax.lax.rsqrt(var + EPS)
    o_ref[...] = (yn * g_ref[...] + beta_ref[...]).astype(o_ref.dtype)


def _block_diag(w, pack):
    """(a, b) -> (pack*a, pack*b) block-diagonal replication."""
    a, b = w.shape
    eye = jnp.eye(pack, dtype=w.dtype)
    return (eye[:, None, :, None] * w[None, :, None, :]).reshape(pack * a, pack * b)


def positionwise_feed_forward(x, w1, b1, w2, b2, gamma, beta, *, tm=2048, target_steps=4):
    """x: [B, S, d_model] float32. Returns same shape. Eval-mode forward."""
    B, S, d_model = x.shape
    d_ff = w1.shape[1]
    assert LANES % d_model == 0, "lane-dense packing requires d_model to divide 128"
    pack = LANES // d_model
    dp = pack * d_model          # 128 (lane-dense activation width)
    fp = pack * d_ff             # packed hidden width

    N = B * S
    x2d = x.reshape(N, d_model).astype(jnp.float32)

    # ---- lane-dense packing: `pack` tokens per 128-lane row ----
    # Only pad the (< pack)-token remainder; the common case (N % pack == 0) is a
    # free contiguous reshape with no HBM copy at all.
    rem = (-N) % pack
    if rem:
        x2d = jnp.pad(x2d, ((0, rem), (0, 0)))
    rows = (N + rem) // pack
    x_packed = x2d.reshape(rows, dp)

    # ---- row tile selection ----
    # Multiple of 8 (or the full row count for tiny inputs); capped so the grid has
    # >= target_steps steps when the input is large enough (lets "parallel" shard
    # across v7x's 2 TensorCores) and never larger than `tm` (VMEM budget, ~14 MiB
    # live at tm=2048 in f32 — fine on v7x's 64 MiB).  Ragged last block is handled
    # by Pallas (OOB reads are garbage rows whose OOB writes are discarded).
    if rows <= 8:
        tm_eff = rows
    else:
        cap = ((pl.cdiv(rows, target_steps) + 7) // 8) * 8
        tm_eff = max(8, min(tm, cap))
    grid = (pl.cdiv(rows, tm_eff),)

    # ---- grid-invariant operands (built once in the wrapper) ----
    w1b = _block_diag(w1.astype(jnp.float32), pack).astype(jnp.bfloat16)   # (128, fp)
    w2b = _block_diag(w2.astype(jnp.float32), pack).astype(jnp.bfloat16)   # (fp, 128)
    seg = _block_diag(
        jnp.full((d_model, d_model), 1.0 / d_model, jnp.float32), pack
    ).astype(jnp.bfloat16)                                                 # (128, 128)
    b1r = jnp.tile(b1.astype(jnp.float32), pack).reshape(1, fp)
    b2r = jnp.tile(b2.astype(jnp.float32), pack).reshape(1, dp)
    gr = jnp.tile(gamma.astype(jnp.float32), pack).reshape(1, dp)
    br = jnp.tile(beta.astype(jnp.float32), pack).reshape(1, dp)

    # advisory cost hint for XLA scheduling
    flops = rows * (2 * dp * fp + 2 * fp * dp + 2 * 2 * dp * dp)
    bytes_accessed = 2 * rows * dp * 4 + 2 * (w1b.size + w2b.size + seg.size)
    cost = pl.CostEstimate(flops=int(flops), transcendentals=int(rows * dp),
                           bytes_accessed=int(bytes_accessed))

    out = pl.pallas_call(
        ffn_kernel,
        out_shape=jax.ShapeDtypeStruct((rows, dp), jnp.float32),
        grid_spec=pltpu.PrefetchScalarGridSpec(
            num_scalar_prefetch=0,
            grid=grid,
            in_specs=[
                pl.BlockSpec((tm_eff, dp), lambda i: (i, 0)),   # packed activations
                pl.BlockSpec((dp, fp), lambda i: (0, 0)),       # block-diag W1 (bf16)
                pl.BlockSpec((1, fp), lambda i: (0, 0)),        # b1 (tiled)
                pl.BlockSpec((fp, dp), lambda i: (0, 0)),       # block-diag W2 (bf16)
                pl.BlockSpec((1, dp), lambda i: (0, 0)),        # b2 (tiled)
                pl.BlockSpec((1, dp), lambda i: (0, 0)),        # LN gamma (tiled)
                pl.BlockSpec((1, dp), lambda i: (0, 0)),        # LN beta (tiled)
                pl.BlockSpec((dp, dp), lambda i: (0, 0)),       # segment-avg matrix (bf16)
            ],
            out_specs=pl.BlockSpec((tm_eff, dp), lambda i: (i, 0)),
        ),
        compiler_params=pltpu.CompilerParams(
            dimension_semantics=("parallel",),
            # safe on every generation (v7x physical VMEM = 64 MiB);
            # measured-style budget at tm=2048 f32 is ~14 MiB live + double-buffers.
            vmem_limit_bytes=40 * 1024 * 1024,
        ),
        cost_estimate=cost,
    )(x_packed, w1b, b1r, w2b, b2r, gr, br, seg)

    out_tokens = out.reshape(rows * pack, d_model)
    if rem:
        out_tokens = out_tokens[:N]
    return out_tokens.reshape(B, S, d_model).astype(x.dtype)


def init_params(key, d_model, d_ff):
    """Deterministic init mimicking nn.Linear defaults (uniform +/- 1/sqrt(fan_in))."""
    k1, k2, k3, k4 = jax.random.split(key, 4)
    bound1 = 1.0 / (d_model ** 0.5)
    bound2 = 1.0 / (d_ff ** 0.5)
    # stored already transposed: W1 is [d_model, d_ff] so that y = x @ W1 + b1
    w1 = jax.random.uniform(k1, (d_model, d_ff), jnp.float32, -bound1, bound1)
    b1 = jax.random.uniform(k2, (d_ff,), jnp.float32, -bound1, bound1)
    w2 = jax.random.uniform(k3, (d_ff, d_model), jnp.float32, -bound2, bound2)
    b2 = jax.random.uniform(k4, (d_model,), jnp.float32, -bound2, bound2)
    gamma = jnp.ones((d_model,), jnp.float32)
    beta = jnp.zeros((d_model,), jnp.float32)
    return w1, b1, w2, b2, gamma, beta


if __name__ == "__main__":
    key = jax.random.PRNGKey(0)
    kx, kp = jax.random.split(key)

    B, S = 2, 8
    x = jax.random.normal(kx, (B, S, D_MODEL), dtype=jnp.float32)
    w1, b1, w2, b2, gamma, beta = init_params(kp, D_MODEL, D_FF)

    out = positionwise_feed_forward(x, w1, b1, w2, b2, gamma, beta)
    out = jax.block_until_ready(out)

    # Reference check in plain JAX (dropout is identity in eval mode).
    # The kernel runs its matmuls with bf16 MXU operands (f32 accumulation), so
    # compare with a bf16-appropriate tolerance.
    h1 = jnp.maximum(x @ w1 + b1, 0.0)
    h2 = h1 @ w2 + b2
    y = h2 + x
    mean = jnp.mean(y, axis=-1, keepdims=True)
    var = jnp.mean((y - mean) ** 2, axis=-1, keepdims=True)
    ref = (y - mean) / jnp.sqrt(var + EPS) * gamma + beta
    assert out.shape == ref.shape
    max_err = jnp.max(jnp.abs(out - ref))
    assert jnp.allclose(out, ref, atol=3e-2, rtol=3e-2), f"mismatch vs reference (max abs err {max_err})"

    print("KERNEL_OK")
</pallas_src>

<mosaic_0001>
module attributes {stable_mosaic.version = 11 : i64} {
  func.func @ffn_kernel(%arg0: i32, %arg1: memref<4x128xf32, #tpu.memory_space<vmem>>, %arg2: memref<128x256xbf16, #tpu.memory_space<vmem>>, %arg3: memref<1x256xf32, #tpu.memory_space<vmem>>, %arg4: memref<256x128xbf16, #tpu.memory_space<vmem>>, %arg5: memref<1x128xf32, #tpu.memory_space<vmem>>, %arg6: memref<1x128xf32, #tpu.memory_space<vmem>>, %arg7: memref<1x128xf32, #tpu.memory_space<vmem>>, %arg8: memref<128x128xbf16, #tpu.memory_space<vmem>>, %arg9: memref<4x128xf32, #tpu.memory_space<vmem>>) attributes {dimension_semantics = [#tpu.dimension_semantics<parallel>], iteration_bounds = array<i64: 1>, scalar_prefetch = 0 : i64, scratch_operands = 0 : i64, tpu.core_type = #tpu.core_type<tc>, window_params = [{transform_indices = @transform_0, window_bounds = array<i64: 4, 128>}, {pipeline_mode = #tpu.pipeline_mode<synchronous>, transform_indices = @transform_1, window_bounds = array<i64: 128, 256>}, {pipeline_mode = #tpu.pipeline_mode<synchronous>, transform_indices = @transform_2, window_bounds = array<i64: 1, 256>}, {pipeline_mode = #tpu.pipeline_mode<synchronous>, transform_indices = @transform_3, window_bounds = array<i64: 256, 128>}, {pipeline_mode = #tpu.pipeline_mode<synchronous>, transform_indices = @transform_4, window_bounds = array<i64: 1, 128>}, {pipeline_mode = #tpu.pipeline_mode<synchronous>, transform_indices = @transform_5, window_bounds = array<i64: 1, 128>}, {pipeline_mode = #tpu.pipeline_mode<synchronous>, transform_indices = @transform_6, window_bounds = array<i64: 1, 128>}, {pipeline_mode = #tpu.pipeline_mode<synchronous>, transform_indices = @transform_7, window_bounds = array<i64: 128, 128>}, {transform_indices = @transform_8, window_bounds = array<i64: 4, 128>}]} {
    %c0 = arith.constant 0 : index
    %c0_0 = arith.constant 0 : index
    %0 = vector.load %arg1[%c0, %c0_0] : memref<4x128xf32, #tpu.memory_space<vmem>>, vector<4x128xf32>
    %1 = arith.truncf %0 : vector<4x128xf32> to vector<4x128xbf16>
    %c0_1 = arith.constant 0 : index
    %c0_2 = arith.constant 0 : index
    %2 = vector.load %arg2[%c0_1, %c0_2] : memref<128x256xbf16, #tpu.memory_space<vmem>>, vector<128x256xbf16>
    %cst = arith.constant dense<0.000000e+00> : vector<4x256xf32>
    %3 = tpu.matmul %1, %2, %cst {dimension_numbers = #tpu.dot_dimension_numbers<[1], [0], [0], [1], [0, 0, 1, 1], [], []>} : vector<4x128xbf16>, vector<128x256xbf16>, vector<4x256xf32> -> vector<4x256xf32>
    %c0_3 = arith.constant 0 : index
    %c0_4 = arith.constant 0 : index
    %4 = vector.load %arg3[%c0_3, %c0_4] : memref<1x256xf32, #tpu.memory_space<vmem>>, vector<1x256xf32>
    %5 = vector.broadcast %4 : vector<1x256xf32> to vector<4x256xf32>
    %6 = arith.addf %3, %5 : vector<4x256xf32>
    %cst_5 = arith.constant 0.000000e+00 : f32
    %7 = vector.broadcast %cst_5 : f32 to vector<4x256xf32>
    %8 = arith.maximumf %6, %7 : vector<4x256xf32>
    %9 = arith.truncf %8 : vector<4x256xf32> to vector<4x256xbf16>
    %c0_6 = arith.constant 0 : index
    %c0_7 = arith.constant 0 : index
    %10 = vector.load %arg4[%c0_6, %c0_7] : memref<256x128xbf16, #tpu.memory_space<vmem>>, vector<256x128xbf16>
    %cst_8 = arith.constant dense<0.000000e+00> : vector<4x128xf32>
    %11 = tpu.matmul %9, %10, %cst_8 {dimension_numbers = #tpu.dot_dimension_numbers<[1], [0], [0], [1], [0, 0, 1, 1], [], []>} : vector<4x256xbf16>, vector<256x128xbf16>, vector<4x128xf32> -> vector<4x128xf32>
    %c0_9 = arith.constant 0 : index
    %c0_10 = arith.constant 0 : index
    %12 = vector.load %arg5[%c0_9, %c0_10] : memref<1x128xf32, #tpu.memory_space<vmem>>, vector<1x128xf32>
    %13 = vector.broadcast %12 : vector<1x128xf32> to vector<4x128xf32>
    %14 = arith.addf %11, %13 : vector<4x128xf32>
    %15 = arith.addf %14, %0 : vector<4x128xf32>
    %c0_11 = arith.constant 0 : index
    %c0_12 = arith.constant 0 : index
    %16 = vector.load %arg8[%c0_11, %c0_12] : memref<128x128xbf16, #tpu.memory_space<vmem>>, vector<128x128xbf16>
    %17 = arith.truncf %15 : vector<4x128xf32> to vector<4x128xbf16>
    %cst_13 = arith.constant dense<0.000000e+00> : vector<4x128xf32>
    %18 = tpu.matmul %17, %16, %cst_13 {dimension_numbers = #tpu.dot_dimension_numbers<[1], [0], [0], [1], [0, 0, 1, 1], [], []>} : vector<4x128xbf16>, vector<128x128xbf16>, vector<4x128xf32> -> vector<4x128xf32>
    %19 = arith.subf %15, %18 : vector<4x128xf32>
    %20 = arith.truncf %19 : vector<4x128xf32> to vector<4x128xbf16>
    %21 = arith.mulf %20, %20 : vector<4x128xbf16>
    %cst_14 = arith.constant dense<0.000000e+00> : vector<4x128xf32>
    %22 = tpu.matmul %21, %16, %cst_14 {dimension_numbers = #tpu.dot_dimension_numbers<[1], [0], [0], [1], [0, 0, 1, 1], [], []>} : vector<4x128xbf16>, vector<128x128xbf16>, vector<4x128xf32> -> vector<4x128xf32>
    %cst_15 = arith.constant 9.99999997E-7 : f32
    %23 = vector.broadcast %cst_15 : f32 to vector<4x128xf32>
    %24 = arith.addf %22, %23 : vector<4x128xf32>
    %25 = math.rsqrt %24 : vector<4x128xf32>
    %26 = arith.mulf %19, %25 : vector<4x128xf32>
    %c0_16 = arith.constant 0 : index
    %c0_17 = arith.constant 0 : index
    %27 = vector.load %arg6[%c0_16, %c0_17] : memref<1x128xf32, #tpu.memory_space<vmem>>, vector<1x128xf32>
    %28 = vector.broadcast %27 : vector<1x128xf32> to vector<4x128xf32>
    %29 = arith.mulf %26, %28 : vector<4x128xf32>
    %c0_18 = arith.constant 0 : index
    %c0_19 = arith.constant 0 : index
    %30 = vector.load %arg7[%c0_18, %c0_19] : memref<1x128xf32, #tpu.memory_space<vmem>>, vector<1x128xf32>
    %31 = vector.broadcast %30 : vector<1x128xf32> to vector<4x128xf32>
    %32 = arith.addf %29, %31 : vector<4x128xf32>
    %c0_20 = arith.constant 0 : index
    %c0_21 = arith.constant 0 : index
    %33 = vector.load %arg9[%c0_20, %c0_21] : memref<4x128xf32, #tpu.memory_space<vmem>>, vector<4x128xf32>
    tpu.vector_store %arg9[%c0_20, %c0_21], %32 {strides = array<i32>} : memref<4x128xf32, #tpu.memory_space<vmem>>, vector<4x128xf32>,
    return
  }
  func.func @transform_0(%arg0: i32) -> (i32, i32) {
    %c0_i32 = arith.constant 0 : i32
    %c0_i32_0 = arith.constant 0 : i32
    return %arg0, %c0_i32 : i32, i32
  }
  func.func @transform_1(%arg0: i32) -> (i32, i32) {
    %c0_i32 = arith.constant 0 : i32
    %c0_i32_0 = arith.constant 0 : i32
    %c0_i32_1 = arith.constant 0 : i32
    return %c0_i32, %c0_i32_0 : i32, i32
  }
  func.func @transform_2(%arg0: i32) -> (i32, i32) {
    %c0_i32 = arith.constant 0 : i32
    %c0_i32_0 = arith.constant 0 : i32
    %c0_i32_1 = arith.constant 0 : i32
    return %c0_i32, %c0_i32_0 : i32, i32
  }
  func.func @transform_3(%arg0: i32) -> (i32, i32) {
    %c0_i32 = arith.constant 0 : i32
    %c0_i32_0 = arith.constant 0 : i32
    %c0_i32_1 = arith.constant 0 : i32
    return %c0_i32, %c0_i32_0 : i32, i32
  }
  func.func @transform_4(%arg0: i32) -> (i32, i32) {
    %c0_i32 = arith.constant 0 : i32
    %c0_i32_0 = arith.constant 0 : i32
    %c0_i32_1 = arith.constant 0 : i32
    return %c0_i32, %c0_i32_0 : i32, i32
  }
  func.func @transform_5(%arg0: i32) -> (i32, i32) {
    %c0_i32 = arith.constant 0 : i32
    %c0_i32_0 = arith.constant 0 : i32
    %c0_i32_1 = arith.constant 0 : i32
    return %c0_i32, %c0_i32_0 : i32, i32
  }
  func.func @transform_6(%arg0: i32) -> (i32, i32) {
    %c0_i32 = arith.constant 0 : i32
    %c0_i32_0 = arith.constant 0 : i32
    %c0_i32_1 = arith.constant 0 : i32
    return %c0_i32, %c0_i32_0 : i32, i32
  }
  func.func @transform_7(%arg0: i32) -> (i32, i32) {
    %c0_i32 = arith.constant 0 : i32
    %c0_i32_0 = arith.constant 0 : i32
    %c0_i32_1 = arith.constant 0 : i32
    return %c0_i32, %c0_i32_0 : i32, i32
  }
  func.func @transform_8(%arg0: i32) -> (i32, i32) {
    %c0_i32 = arith.constant 0 : i32
    %c0_i32_0 = arith.constant 0 : i32
    return %arg0, %c0_i32 : i32, i32
  }
}

</mosaic_0001>

<llo_original>
// kernel: tpu_custom_call.1
$region0: #{tpu_custom_call.1}
  #allocation0 [shape = 'u32[]', space=smem, size = 0x4, offset = 0x4, fixed_abs, tag = 'smem constant byte address 0x4 - core index']
  #allocation1 [shape = 'u32[72,128]{1,0:T(1,128)}', space=vmem, size = 0x9000, scoped, tag = 'internal scratch']
  %s0 = inlined_call_operand.hbm [shape: f32[4,128], index: 0, kind: input, shape index: {}]
  %s1 = inlined_call_operand.hbm [shape: bf16[128,256], index: 1, kind: input, shape index: {}]
  %s2 = inlined_call_operand.hbm [shape: f32[1,256], index: 2, kind: input, shape index: {}]
  %s3 = inlined_call_operand.hbm [shape: bf16[256,128], index: 3, kind: input, shape index: {}]
  %s4 = inlined_call_operand.vmem [shape: f32[1,128], index: 4, kind: input, shape index: {}]
  %s5 = inlined_call_operand.vmem [shape: f32[1,128], index: 5, kind: input, shape index: {}]
  %s6 = inlined_call_operand.vmem [shape: f32[1,128], index: 6, kind: input, shape index: {}]
  %s7 = inlined_call_operand.hbm [shape: bf16[128,128], index: 7, kind: input, shape index: {}]
  %s8 = inlined_call_operand.hbm [shape: f32[4,128], index: 8, kind: output, shape index: {}]
  %s9 = sld [smem:[#allocation0]]
  $region62: #{tpu_custom_call.1} parent=0
    _
  %s11 = ssub.s32 1, %s9
  %s12 = scalar_select 0, %s11, %s9
  $region1: #{tpu_custom_call.1} parent=0
    #allocation2 [shape = 'u8[2048]{0}', space=vmem, size = 0x800, scoped, tag = 'input window, operand 0, single buffered']
    #allocation3 [shape = 's32[1]{0}', space=sflag, size = 0x4, scoped, tag = 'scoped memory for tpu_custom_call.1']
    #allocation4 [shape = 's32[1]{0}', space=sflag, size = 0x4, scoped, tag = 'scoped memory for tpu_custom_call.1']
    #allocation5 [shape = 'u8[65536]{0}', space=vmem, size = 0x10000, scoped, tag = 'input window, operand 1, single buffered']
    #allocation6 [shape = 's32[1]{0}', space=sflag, size = 0x4, scoped, tag = 'scoped memory for tpu_custom_call.1']
    #allocation7 [shape = 'u8[1024]{0}', space=vmem, size = 0x400, scoped, tag = 'input window, operand 2, single buffered']
    #allocation8 [shape = 'u8[65536]{0}', space=vmem, size = 0x10000, scoped, tag = 'input window, operand 3, single buffered']
    #allocation9 [shape = 's32[1]{0}', space=sflag, size = 0x4, scoped, tag = 'scoped memory for tpu_custom_call.1']
    #allocation10 [shape = 'u8[32768]{0}', space=vmem, size = 0x8000, scoped, tag = 'input window, operand 7, single buffered']
    #allocation11 [shape = 'u8[2048]{0}', space=vmem, size = 0x800, scoped, tag = 'output window, operand 0, single buffered']
    %13 = vsyncpa [#allocation3], 0
    %14 = vsyncpa [#allocation6], 0
    %15 = vsyncpa [#allocation9], 0
    %16 = vsyncpa [#allocation4], 0
    // Predicated region
    $region2: #{tpu_custom_call.1} parent=1 // pred_check
      _
    $region3: #{tpu_custom_call.1} parent=1 // pred_check_branch
      %18 = sbr.rel (0) target = $region5
    $region4: #{tpu_custom_call.1} parent=1 // pred_region
      %20 = vsyncadd [#allocation3], 0
      %s22 = sshll.u32 %s0, 4
      %s23 = int_to_ptr.hbm [resolvable:$true] %s22
      %s24 = sshll.u32 [#allocation2], 4
      %s25 = int_to_ptr.vmem [resolvable:$true] %s24
      %27 = dma.hbm_to_vmem [thread:$0]  %s23, 64, %s25, [#allocation3]
    $region5: #{tpu_custom_call.1} parent=1 // pred_fallthru
      _
    // Predicated region
    $region6: #{tpu_custom_call.1} parent=1 // pred_check
      _
    $region7: #{tpu_custom_call.1} parent=1 // pred_check_branch
      %29 = sbr.rel (0) target = $region9
    $region8: #{tpu_custom_call.1} parent=1 // pred_region
      %31 = vsyncadd [#allocation6], 0
      %s32 = sshll.u32 %s1, 4
      %s33 = int_to_ptr.hbm [resolvable:$true] %s32
      %s34 = sshll.u32 [#allocation5], 4
      %s35 = int_to_ptr.vmem [resolvable:$true] %s34
      %40 = dma.hbm_to_vmem [thread:$0]  %s33, 2048, %s35, [#allocation6], 128, 128, 8
    $region9: #{tpu_custom_call.1} parent=1 // pred_fallthru
      _
    // Predicated region
    $region10: #{tpu_custom_call.1} parent=1 // pred_check
      _
    $region11: #{tpu_custom_call.1} parent=1 // pred_check_branch
      %42 = sbr.rel (0) target = $region13
    $region12: #{tpu_custom_call.1} parent=1 // pred_region
      %44 = vsyncadd [#allocation6], 0
      %s46 = sshll.u32 %s2, 4
      %s47 = int_to_ptr.hbm [resolvable:$true] %s46
      %s48 = sshll.u32 [#allocation7], 4
      %s49 = int_to_ptr.vmem [resolvable:$true] %s48
      %51 = dma.hbm_to_vmem [thread:$0]  %s47, 32, %s49, [#allocation6]
    $region13: #{tpu_custom_call.1} parent=1 // pred_fallthru
      _
    // Predicated region
    $region14: #{tpu_custom_call.1} parent=1 // pred_check
      _
    $region15: #{tpu_custom_call.1} parent=1 // pred_check_branch
      %53 = sbr.rel (0) target = $region17
    $region16: #{tpu_custom_call.1} parent=1 // pred_region
      %55 = vsyncadd [#allocation9], 0
      %s56 = sshll.u32 %s3, 4
      %s57 = int_to_ptr.hbm [resolvable:$true] %s56
      %s58 = sshll.u32 [#allocation8], 4
      %s59 = int_to_ptr.vmem [resolvable:$true] %s58
      %64 = dma.hbm_to_vmem [thread:$0]  %s57, 2048, %s59, [#allocation9], 64, 64, 4
    $region17: #{tpu_custom_call.1} parent=1 // pred_fallthru
      _
    // Predicated region
    $region18: #{tpu_custom_call.1} parent=1 // pred_check
      _
    $region19: #{tpu_custom_call.1} parent=1 // pred_check_branch
      %66 = sbr.rel (0) target = $region21
    $region20: #{tpu_custom_call.1} parent=1 // pred_region
      _
    $region21: #{tpu_custom_call.1} parent=1 // pred_fallthru
      _
    // Predicated region
    $region22: #{tpu_custom_call.1} parent=1 // pred_check
      _
    $region23: #{tpu_custom_call.1} parent=1 // pred_check_branch
      %68 = sbr.rel (0) target = $region25
    $region24: #{tpu_custom_call.1} parent=1 // pred_region
      _
    $region25: #{tpu_custom_call.1} parent=1 // pred_fallthru
      _
    // Predicated region
    $region26: #{tpu_custom_call.1} parent=1 // pred_check
      _
    $region27: #{tpu_custom_call.1} parent=1 // pred_check_branch
      %70 = sbr.rel (0) target = $region29
    $region28: #{tpu_custom_call.1} parent=1 // pred_region
      _
    $region29: #{tpu_custom_call.1} parent=1 // pred_fallthru
      _
    // Predicated region
    $region30: #{tpu_custom_call.1} parent=1 // pred_check
      _
    $region31: #{tpu_custom_call.1} parent=1 // pred_check_branch
      %72 = sbr.rel (0) target = $region33
    $region32: #{tpu_custom_call.1} parent=1 // pred_region
      %74 = vsyncadd [#allocation9], 0
      %s75 = sshll.u32 %s7, 4
      %s76 = int_to_ptr.hbm [resolvable:$true] %s75
      %s77 = sshll.u32 [#allocation10], 4
      %s78 = int_to_ptr.vmem [resolvable:$true] %s77
      %83 = dma.hbm_to_vmem [thread:$0]  %s76, 1024, %s78, [#allocation9], 64, 64, 4
    $region33: #{tpu_custom_call.1} parent=1 // pred_fallthru
      _
    // Predicated region
    $region34: #{tpu_custom_call.1} parent=1 // pred_check
      _
    $region35: #{tpu_custom_call.1} parent=1 // pred_check_branch
      %85 = sbr.rel (0) target = $region37
    $region36: #{tpu_custom_call.1} parent=1 // pred_region
      %87 = dma.done [#allocation3], 64
    $region37: #{tpu_custom_call.1} parent=1 // pred_fallthru
      _
    // Predicated region
    $region38: #{tpu_custom_call.1} parent=1 // pred_check
      _
    $region39: #{tpu_custom_call.1} parent=1 // pred_check_branch
      %89 = sbr.rel (0) target = $region41
    $region40: #{tpu_custom_call.1} parent=1 // pred_region
      %91 = dma.done [#allocation6], 2048
    $region41: #{tpu_custom_call.1} parent=1 // pred_fallthru
      _
    // Predicated region
    $region42: #{tpu_custom_call.1} parent=1 // pred_check
      _
    $region43: #{tpu_custom_call.1} parent=1 // pred_check_branch
      %93 = sbr.rel (0) target = $region45
    $region44: #{tpu_custom_call.1} parent=1 // pred_region
      %95 = dma.done [#allocation6], 32
    $region45: #{tpu_custom_call.1} parent=1 // pred_fallthru
      _
    // Predicated region
    $region46: #{tpu_custom_call.1} parent=1 // pred_check
      _
    $region47: #{tpu_custom_call.1} parent=1 // pred_check_branch
      %97 = sbr.rel (0) target = $region49
    $region48: #{tpu_custom_call.1} parent=1 // pred_region
      %99 = dma.done [#allocation9], 2048
    $region49: #{tpu_custom_call.1} parent=1 // pred_fallthru
      _
    // Predicated region
    $region50: #{tpu_custom_call.1} parent=1 // pred_check
      _
    $region51: #{tpu_custom_call.1} parent=1 // pred_check_branch
      %101 = sbr.rel (0) target = $region53
    $region52: #{tpu_custom_call.1} parent=1 // pred_region
      %103 = dma.done [#allocation9], 1024
    $region53: #{tpu_custom_call.1} parent=1 // pred_fallthru
      _
    %v104 = vld [vmem:[#allocation2] sm:$0xf]
    %v105 = vpack.c.bf16 %v104, %v104
    %v106 = vld [vmem:[#allocation5] sm:$0xff]
    %v107 = vld [vmem:[#allocation5 + $0x8] sm:$0xff]
    %v108 = vld [vmem:[#allocation5 + $0x10] sm:$0xff]
    %v109 = vld [vmem:[#allocation5 + $0x18] sm:$0xff]
    %v110 = vld [vmem:[#allocation5 + $0x20] sm:$0xff]
    %v111 = vld [vmem:[#allocation5 + $0x28] sm:$0xff]
    %v112 = vld [vmem:[#allocation5 + $0x30] sm:$0xff]
    %v113 = vld [vmem:[#allocation5 + $0x38] sm:$0xff]
    %v114 = vld [vmem:[#allocation5 + $0x40] sm:$0xff]
    %v115 = vld [vmem:[#allocation5 + $0x48] sm:$0xff]
    %v116 = vld [vmem:[#allocation5 + $0x50] sm:$0xff]
    %v117 = vld [vmem:[#allocation5 + $0x58] sm:$0xff]
    %v118 = vld [vmem:[#allocation5 + $0x60] sm:$0xff]
    %v119 = vld [vmem:[#allocation5 + $0x68] sm:$0xff]
    %v120 = vld [vmem:[#allocation5 + $0x70] sm:$0xff]
    %v121 = vld [vmem:[#allocation5 + $0x78] sm:$0xff]
    %v122 = vld [vmem:[#allocation7] sm:$0x3]
    %v124 = vperm.slane %v122, 0
    %v125 = vperm.slane %v122, 1
    %v144 = vunpack.c.l.b16 %v106
    %v145 = vunpack.c.h.b16 %v106
    %v146 = vunpack.c.l.b16 %v107
    %v147 = vunpack.c.h.b16 %v107
    %v148 = vunpack.c.l.b16 %v108
    %v149 = vunpack.c.h.b16 %v108
    %v150 = vunpack.c.l.b16 %v109
    %v151 = vunpack.c.h.b16 %v109
    %v152 = vunpack.c.l.b16 %v110
    %v153 = vunpack.c.h.b16 %v110
    %v154 = vunpack.c.l.b16 %v111
    %v155 = vunpack.c.h.b16 %v111
    %v156 = vunpack.c.l.b16 %v112
    %v157 = vunpack.c.h.b16 %v112
    %v158 = vunpack.c.l.b16 %v113
    %v159 = vunpack.c.h.b16 %v113
    %v160 = vunpack.c.l.b16 %v114
    %v161 = vunpack.c.h.b16 %v114
    %v162 = vunpack.c.l.b16 %v115
    %v163 = vunpack.c.h.b16 %v115
    %v164 = vunpack.c.l.b16 %v116
    %v165 = vunpack.c.h.b16 %v116
    %v166 = vunpack.c.l.b16 %v117
    %v167 = vunpack.c.h.b16 %v117
    %v168 = vunpack.c.l.b16 %v118
    %v169 = vunpack.c.h.b16 %v118
    %v170 = vunpack.c.l.b16 %v119
    %v171 = vunpack.c.h.b16 %v119
    %v172 = vunpack.c.l.b16 %v120
    %v173 = vunpack.c.h.b16 %v120
    %v174 = vunpack.c.l.b16 %v121
    %v175 = vunpack.c.h.b16 %v121
    %v176 = vpack.c.b16 %v146, %v144
    %v177 = vpack.c.b16 %v147, %v145
    %v178 = vpack.c.b16 %v150, %v148
    %v179 = vpack.c.b16 %v151, %v149
    %v180 = vpack.c.b16 %v154, %v152
    %v181 = vpack.c.b16 %v155, %v153
    %v182 = vpack.c.b16 %v158, %v156
    %v183 = vpack.c.b16 %v159, %v157
    %v184 = vpack.c.b16 %v162, %v160
    %v185 = vpack.c.b16 %v163, %v161
    %v186 = vpack.c.b16 %v166, %v164
    %v187 = vpack.c.b16 %v167, %v165
    %v188 = vpack.c.b16 %v170, %v168
    %v189 = vpack.c.b16 %v171, %v169
    %v190 = vpack.c.b16 %v174, %v172
    %v191 = vpack.c.b16 %v175, %v173
    %208 = vmatpush.bf16.msra.mxu0 %v190
    %209 = vmatpush.bf16.msra.mxu0 %v188
    %210 = vmatpush.bf16.msra.mxu0 %v186
    %211 = vmatpush.bf16.msra.mxu0 %v184
    %212 = vmatpush.bf16.msra.mxu0 %v182
    %213 = vmatpush.bf16.msra.mxu0 %v180
    %214 = vmatpush.bf16.msra.mxu0 %v178
    %215 = vmatpush.bf16.msra.mxu0 %v176
    %216 = vmatmul.bf16.gmra.mxu0 %v105
    %v217 = vpop.f32.mrf.mxu0
    %v218 = vadd.f32 %v124, %v217
    %v219 = vpop.f32.mrf.mxu0
    %220 = vdwg.mxu0
    %221 = vmatpush.bf16.msra.mxu0 %v191
    %222 = vmatpush.bf16.msra.mxu0 %v189
    %223 = vmatpush.bf16.msra.mxu0 %v187
    %224 = vmatpush.bf16.msra.mxu0 %v185
    %225 = vmatpush.bf16.msra.mxu0 %v183
    %226 = vmatpush.bf16.msra.mxu0 %v181
    %227 = vmatpush.bf16.msra.mxu0 %v179
    %228 = vmatpush.bf16.msra.mxu0 %v177
    %229 = vmatmul.bf16.gmra.mxu0 %v105
    %v230 = vpop.f32.mrf.mxu0
    %v231 = vadd.f32 %v125, %v230
    %v232 = vpop.f32.mrf.mxu0
    %233 = vdwg.mxu0
    %v234 = vmax.f32 %v218, 0.0
    %v235 = vmax.f32 %v231, 0.0
    %v236 = vpack.c.bf16 %v234, %v234
    %v237 = vpack.c.bf16 %v235, %v235
    %v238 = vld [vmem:[#allocation8] sm:$0xf]
    %v239 = vld [vmem:[#allocation8 + $0x4] sm:$0xf]
    %v240 = vld [vmem:[#allocation8 + $0x8] sm:$0xf]
    %v241 = vld [vmem:[#allocation8 + $0xc] sm:$0xf]
    %v242 = vld [vmem:[#allocation8 + $0x10] sm:$0xf]
    %v243 = vld [vmem:[#allocation8 + $0x14] sm:$0xf]
    %v244 = vld [vmem:[#allocation8 + $0x18] sm:$0xf]
    %v245 = vld [vmem:[#allocation8 + $0x1c] sm:$0xf]
    %v246 = vld [vmem:[#allocation8 + $0x20] sm:$0xf]
    %v247 = vld [vmem:[#allocation8 + $0x24] sm:$0xf]
    %v248 = vld [vmem:[#allocation8 + $0x28] sm:$0xf]
    %v249 = vld [vmem:[#allocation8 + $0x2c] sm:$0xf]
    %v250 = vld [vmem:[#allocation8 + $0x30] sm:$0xf]
    %v251 = vld [vmem:[#allocation8 + $0x34] sm:$0xf]
    %v252 = vld [vmem:[#allocation8 + $0x38] sm:$0xf]
    %v253 = vld [vmem:[#allocation8 + $0x3c] sm:$0xf]
    %v254 = vld [vmem:[#allocation8 + $0x40] sm:$0xf]
    %v255 = vld [vmem:[#allocation8 + $0x44] sm:$0xf]
    %v256 = vld [vmem:[#allocation8 + $0x48] sm:$0xf]
    %v257 = vld [vmem:[#allocation8 + $0x4c] sm:$0xf]
    %v258 = vld [vmem:[#allocation8 + $0x50] sm:$0xf]
    %v259 = vld [vmem:[#allocation8 + $0x54] sm:$0xf]
    %v260 = vld [vmem:[#allocation8 + $0x58] sm:$0xf]
    %v261 = vld [vmem:[#allocation8 + $0x5c] sm:$0xf]
    %v262 = vld [vmem:[#allocation8 + $0x60] sm:$0xf]
    %v263 = vld [vmem:[#allocation8 + $0x64] sm:$0xf]
    %v264 = vld [vmem:[#allocation8 + $0x68] sm:$0xf]
    %v265 = vld [vmem:[#allocation8 + $0x6c] sm:$0xf]
    %v266 = vld [vmem:[#allocation8 + $0x70] sm:$0xf]
    %v267 = vld [vmem:[#allocation8 + $0x74] sm:$0xf]
    %v268 = vld [vmem:[#allocation8 + $0x78] sm:$0xf]
    %v269 = vld [vmem:[#allocation8 + $0x7c] sm:$0xf]
    %v270 = vld [vmem:[%s4] sm:$0x1]
    %v272 = vperm.slane %v270, 0
    %v306 = vunpack.c.l.b16 %v238
    %v307 = vunpack.c.l.b16 %v239
    %v308 = vunpack.c.l.b16 %v240
    %v309 = vunpack.c.l.b16 %v241
    %v310 = vunpack.c.l.b16 %v242
    %v311 = vunpack.c.l.b16 %v243
    %v312 = vunpack.c.l.b16 %v244
    %v313 = vunpack.c.l.b16 %v245
    %v314 = vunpack.c.l.b16 %v246
    %v315 = vunpack.c.l.b16 %v247
    %v316 = vunpack.c.l.b16 %v248
    %v317 = vunpack.c.l.b16 %v249
    %v318 = vunpack.c.l.b16 %v250
    %v319 = vunpack.c.l.b16 %v251
    %v320 = vunpack.c.l.b16 %v252
    %v321 = vunpack.c.l.b16 %v253
    %v322 = vunpack.c.l.b16 %v254
    %v323 = vunpack.c.l.b16 %v255
    %v324 = vunpack.c.l.b16 %v256
    %v325 = vunpack.c.l.b16 %v257
    %v326 = vunpack.c.l.b16 %v258
    %v327 = vunpack.c.l.b16 %v259
    %v328 = vunpack.c.l.b16 %v260
    %v329 = vunpack.c.l.b16 %v261
    %v330 = vunpack.c.l.b16 %v262
    %v331 = vunpack.c.l.b16 %v263
    %v332 = vunpack.c.l.b16 %v264
    %v333 = vunpack.c.l.b16 %v265
    %v334 = vunpack.c.l.b16 %v266
    %v335 = vunpack.c.l.b16 %v267
    %v336 = vunpack.c.l.b16 %v268
    %v337 = vunpack.c.l.b16 %v269
    %v338 = vpack.c.b16 %v307, %v306
    %v339 = vpack.c.b16 %v309, %v308
    %v340 = vpack.c.b16 %v311, %v310
    %v341 = vpack.c.b16 %v313, %v312
    %v342 = vpack.c.b16 %v315, %v314
    %v343 = vpack.c.b16 %v317, %v316
    %v344 = vpack.c.b16 %v319, %v318
    %v345 = vpack.c.b16 %v321, %v320
    %v346 = vpack.c.b16 %v323, %v322
    %v347 = vpack.c.b16 %v325, %v324
    %v348 = vpack.c.b16 %v327, %v326
    %v349 = vpack.c.b16 %v329, %v328
    %v350 = vpack.c.b16 %v331, %v330
    %v351 = vpack.c.b16 %v333, %v332
    %v352 = vpack.c.b16 %v335, %v334
    %v353 = vpack.c.b16 %v337, %v336
    %370 = vmatpush.bf16.msra.mxu0 %v345
    %371 = vmatpush.bf16.msra.mxu0 %v344
    %372 = vmatpush.bf16.msra.mxu0 %v343
    %373 = vmatpush.bf16.msra.mxu0 %v342
    %374 = vmatpush.bf16.msra.mxu0 %v341
    %375 = vmatpush.bf16.msra.mxu0 %v340
    %376 = vmatpush.bf16.msra.mxu0 %v339
    %377 = vmatpush.bf16.msra.mxu0 %v338
    %378 = vmatmul.bf16.gmra.mxu0 %v236
    %v379 = vpop.f32.mrf.mxu0
    %v380 = vadd.f32 %v272, %v379
    %v381 = vpop.f32.mrf.mxu0
    %382 = vdwg.mxu0
    %383 = vmatpush.bf16.msra.mxu0 %v353
    %384 = vmatpush.bf16.msra.mxu0 %v352
    %385 = vmatpush.bf16.msra.mxu0 %v351
    %386 = vmatpush.bf16.msra.mxu0 %v350
    %387 = vmatpush.bf16.msra.mxu0 %v349
    %388 = vmatpush.bf16.msra.mxu0 %v348
    %389 = vmatpush.bf16.msra.mxu0 %v347
    %390 = vmatpush.bf16.msra.mxu0 %v346
    %391 = vmatmul.bf16.gmra.mxu0 %v237
    %v392 = vpop.f32.mrf.mxu0
    %v393 = vadd.f32 %v380, %v392
    %v394 = vpop.f32.mrf.mxu0
    %395 = vdwg.mxu0
    %v396 = vadd.f32 %v393, %v104
    %v397 = vld [vmem:[#allocation10] sm:$0xf]
    %v398 = vld [vmem:[#allocation10 + $0x4] sm:$0xf]
    %v399 = vld [vmem:[#allocation10 + $0x8] sm:$0xf]
    %v400 = vld [vmem:[#allocation10 + $0xc] sm:$0xf]
    %v401 = vld [vmem:[#allocation10 + $0x10] sm:$0xf]
    %v402 = vld [vmem:[#allocation10 + $0x14] sm:$0xf]
    %v403 = vld [vmem:[#allocation10 + $0x18] sm:$0xf]
    %v404 = vld [vmem:[#allocation10 + $0x1c] sm:$0xf]
    %v405 = vld [vmem:[#allocation10 + $0x20] sm:$0xf]
    %v406 = vld [vmem:[#allocation10 + $0x24] sm:$0xf]
    %v407 = vld [vmem:[#allocation10 + $0x28] sm:$0xf]
    %v408 = vld [vmem:[#allocation10 + $0x2c] sm:$0xf]
    %v409 = vld [vmem:[#allocation10 + $0x30] sm:$0xf]
    %v410 = vld [vmem:[#allocation10 + $0x34] sm:$0xf]
    %v411 = vld [vmem:[#allocation10 + $0x38] sm:$0xf]
    %v412 = vld [vmem:[#allocation10 + $0x3c] sm:$0xf]
    %v413 = vpack.c.bf16 %v396, %v396
    %v430 = vunpack.c.l.b16 %v397
    %v431 = vunpack.c.l.b16 %v398
    %v432 = vunpack.c.l.b16 %v399
    %v433 = vunpack.c.l.b16 %v400
    %v434 = vunpack.c.l.b16 %v401
    %v435 = vunpack.c.l.b16 %v402
    %v436 = vunpack.c.l.b16 %v403
    %v437 = vunpack.c.l.b16 %v404
    %v438 = vunpack.c.l.b16 %v405
    %v439 = vunpack.c.l.b16 %v406
    %v440 = vunpack.c.l.b16 %v407
    %v441 = vunpack.c.l.b16 %v408
    %v442 = vunpack.c.l.b16 %v409
    %v443 = vunpack.c.l.b16 %v410
    %v444 = vunpack.c.l.b16 %v411
    %v445 = vunpack.c.l.b16 %v412
    %v446 = vpack.c.b16 %v431, %v430
    %v447 = vpack.c.b16 %v433, %v432
    %v448 = vpack.c.b16 %v435, %v434
    %v449 = vpack.c.b16 %v437, %v436
    %v450 = vpack.c.b16 %v439, %v438
    %v451 = vpack.c.b16 %v441, %v440
    %v452 = vpack.c.b16 %v443, %v442
    %v453 = vpack.c.b16 %v445, %v444
    %462 = vmatpush.bf16.msra.mxu0 %v453
    %463 = vmatpush.bf16.msra.mxu0 %v452
    %464 = vmatpush.bf16.msra.mxu0 %v451
    %465 = vmatpush.bf16.msra.mxu0 %v450
    %466 = vmatpush.bf16.msra.mxu0 %v449
    %467 = vmatpush.bf16.msra.mxu0 %v448
    %468 = vmatpush.bf16.msra.mxu0 %v447
    %469 = vmatpush.bf16.msra.mxu0 %v446
    %470 = vmatmul.bf16.gmra.mxu0 %v413
    %v471 = vpop.f32.mrf.mxu0
    %v472 = vadd.f32 0.0, %v471
    %v473 = vpop.f32.mrf.mxu0
    %474 = vdwg.mxu0
    %v475 = vsub.f32 %v396, %v472
    %v476 = vpack.c.bf16 %v475, %v475
    %v477 = vunpack.c.l.bf16 %v476
    %v478 = vmul.f32 %v477, %v477
    %v479 = vpack.c.bf16 %v478, %v478
    %480 = vmatpush.bf16.msra.mxu0 %v453
    %481 = vmatpush.bf16.msra.mxu0 %v452
    %482 = vmatpush.bf16.msra.mxu0 %v451
    %483 = vmatpush.bf16.msra.mxu0 %v450
    %484 = vmatpush.bf16.msra.mxu0 %v449
    %485 = vmatpush.bf16.msra.mxu0 %v448
    %486 = vmatpush.bf16.msra.mxu0 %v447
    %487 = vmatpush.bf16.msra.mxu0 %v446
    %488 = vmatmul.bf16.gmra.mxu0 %v479
    %v489 = vpop.f32.mrf.mxu0
    %v490 = vadd.f32 1e-06, %v489
    %v491 = vpop.f32.mrf.mxu0
    %492 = vdwg.mxu0
    %v493 = vrsqrt.pop %v490
    %v494 = vmul.f32 %v493, %v490
    %v495 = vmul.f32 %v494, %v493
    %v496 = vmul.f32 0.5, %v495
    %v497 = vsub.f32 1.5, %v496
    %v498 = vmul.f32 %v493, %v497
    %vm499 = vweird.f32 %v490
    %vm500 = vweird.f32 %v493
    %vm501 = vmor %vm499, %vm500
    %v502 = vsel %vm501, %v493, %v498
    %v503 = vmul.f32 %v475, %v502
    %v504 = vld [vmem:[%s5] sm:$0x1]
    %v506 = vperm.slane %v504, 0
    %v508 = vmul.f32 %v503, %v506
    %v509 = vld [vmem:[%s6] sm:$0x1]
    %v511 = vperm.slane %v509, 0
    %v513 = vadd.f32 %v508, %v511
    %514 = vst [vmem:[#allocation11] sm:$0xf] %v513
    // Predicated region
    $region54: #{tpu_custom_call.1} parent=1 // pred_check
      _
    $region55: #{tpu_custom_call.1} parent=1 // pred_check_branch
      %516 = sbr.rel (0) target = $region57
    $region56: #{tpu_custom_call.1} parent=1 // pred_region
      %518 = vsyncadd [#allocation4], 0
      %s520 = sshll.u32 [#allocation11], 4
      %s521 = int_to_ptr.vmem [resolvable:$true] %s520
      %s522 = sshll.u32 %s8, 4
      %s523 = int_to_ptr.hbm [resolvable:$true] %s522
      %525 = dma.vmem_to_hbm [thread:$0]  %s521, 64, %s523, [#allocation4]
    $region57: #{tpu_custom_call.1} parent=1 // pred_fallthru
      _
    // Predicated region
    $region58: #{tpu_custom_call.1} parent=1 // pred_check
      _
    $region59: #{tpu_custom_call.1} parent=1 // pred_check_branch
      %527 = sbr.rel (0) target = $region61
    $region60: #{tpu_custom_call.1} parent=1 // pred_region
      %529 = dma.done [#allocation4], 64
    $region61: #{tpu_custom_call.1} parent=1 // pred_fallthru
      _
    %530 = vsyncpa [#allocation3], 1
    %531 = vsyncpa [#allocation6], 1
    %532 = vsyncpa [#allocation9], 1
    %533 = vsyncpa [#allocation4], 1

</llo_original>
